<compile_context>
chip_gen: v6e
topology: v6e:2x2x1
jax: 0.10.0
libtpu: 0.0.40
codegen_flags: <defaults>
</compile_context>

<pallas_src>
import jax
import jax.numpy as jnp
import numpy as np
from jax.experimental import pallas as pl
from jax.experimental.pallas import tpu as pltpu

_S_TILE = 512  # tokens per grid step (lane axis, multiple of 128)


def _decode_kernel(idx_ref, table_ref, out_ref):
    """out[0, :] = table[idx[0, :], 0] via one-hot over the vocab (sublane) axis.

    idx_ref   : (1, S_TILE) int32  -- tokens on the lane axis (lane-dense)
    table_ref : (V, 1)      int32  -- vocab on the sublane axis (resident)
    out_ref   : (1, S_TILE) int32  -- decoded codepoints, lane-dense
    """
    idx = idx_ref[...]                                   # (1, S_TILE)
    table = table_ref[...]                               # (V, 1)
    v = table.shape[0]
    st = idx.shape[1]
    # one-hot over the vocab (sublane) axis; tokens stay on lanes
    vocab_iota = jax.lax.broadcasted_iota(jnp.int32, (v, st), 0)
    onehot = (idx == vocab_iota).astype(jnp.int32)       # (V, S_TILE)
    # mul + sublane reduction (cheaper than a cross-lane reduce; result is
    # already lane-dense, so the store is a full-width unmasked vst)
    gathered = jnp.sum(onehot * table, axis=0, keepdims=True)   # (1, S_TILE)
    out_ref[...] = gathered


def decode_tokens(token_ids: jax.Array, table: jax.Array, *, s_tile: int = _S_TILE) -> jax.Array:
    """Pallas gather: token_ids (S,) int -> decoded codepoints (S,) int32.

    table: (V,) int32 codepoint table, kept resident in VMEM across the grid.
    Tokens are padded to a multiple of s_tile and laid out on the lane axis.
    """
    S = int(token_ids.shape[0])
    V = int(table.shape[0])
    s_pad = ((S + s_tile - 1) // s_tile) * s_tile

    idx_2d = jnp.pad(token_ids.astype(jnp.int32), (0, s_pad - S)).reshape(1, s_pad)
    table_2d = table.reshape(V, 1).astype(jnp.int32)

    out = pl.pallas_call(
        _decode_kernel,
        out_shape=jax.ShapeDtypeStruct((1, s_pad), jnp.int32),
        grid=(s_pad // s_tile,),
        in_specs=[
            # tokens: tile along the lane axis, S_TILE per grid step
            pl.BlockSpec((1, s_tile), lambda i: (0, i)),
            # vocab table: full extent, resident across all grid steps
            pl.BlockSpec((V, 1), lambda i: (0, 0)),
        ],
        out_specs=pl.BlockSpec((1, s_tile), lambda i: (0, i)),
        compiler_params=pltpu.CompilerParams(
            # independent tiles: lets v7x split the grid across its 2 TCs
            dimension_semantics=("parallel",)),
    )(idx_2d, table_2d)

    return out[0, :S]


class Transform:
    def __call__(self, x):
        return self.forward(x)

    def forward(self, x):
        raise NotImplementedError()


class Compose(Transform):
    """JAX port of blvm.data.transforms.Compose: apply transforms in order."""

    def __init__(self, *transforms):
        self.transforms = [t for t in transforms if t is not None]

    def forward(self, x):
        for transform in self.transforms:
            x = transform(x)
        return x


class DecodeInteger(Transform):
    """token ids -> string, with the table lookup done in the Pallas kernel.

    token_table[i] = codepoint of the character that token id i decodes to.
    """

    def __init__(self, join_token: str, token_table: jax.Array):
        self.join_token = join_token
        self.token_table = token_table

    def forward(self, x: jax.Array) -> str:
        S = int(x.shape[0])
        if S == 0:
            return self.join_token.join([])
        # TODO(synk): out-of-range/negative ids decode to 0 (NUL) instead of
        # raising like a dict lookup; validate/clamp upstream if needed.
        codes = decode_tokens(x, self.token_table)
        codes = jax.block_until_ready(codes)
        # single bulk device->host transfer; no per-token device syncs
        host = np.asarray(jax.device_get(codes))
        # TODO(synk): string join has no Pallas equivalent; done on host.
        return self.join_token.join(map(chr, host.tolist()))


if __name__ == "__main__":
    key = jax.random.PRNGKey(0)

    # deterministic "token_map": vocab of 128 ids -> printable ascii chars
    V = 128
    ids = jnp.arange(V, dtype=jnp.int32)
    table = jnp.where(ids < 10, ids + ord("0"), (ids - 10) % 26 + ord("a"))
    table = table.astype(jnp.int32)

    # token id sequence: spans two 512-token lane tiles and exercises padding
    S = 1000
    x = jax.random.randint(key, (S,), minval=0, maxval=V, dtype=jnp.int32)

    # Compose semantics: None transforms are filtered, the rest applied in order
    transform = Compose(None, DecodeInteger(join_token="", token_table=table))
    decoded = transform(x)

    # reference check (host gather)
    table_h = np.asarray(jax.device_get(table))
    x_h = np.asarray(jax.device_get(x))
    ref = "".join(chr(int(table_h[int(t)])) for t in x_h)
    assert decoded == ref, "decode mismatch vs host reference"

    # run the raw kernel once more and block on it explicitly
    codes = jax.block_until_ready(decode_tokens(x, table))
    assert codes.shape == (S,) and codes.dtype == jnp.int32

    print("KERNEL_OK")
</pallas_src>

<mosaic_0001>
module attributes {stable_mosaic.version = 11 : i64} {
  func.func @_decode_kernel(%arg0: i32, %arg1: memref<1x512xi32, #tpu.memory_space<vmem>>, %arg2: memref<128x1xi32, #tpu.memory_space<vmem>>, %arg3: memref<1x512xi32, #tpu.memory_space<vmem>>) attributes {dimension_semantics = [#tpu.dimension_semantics<parallel>], iteration_bounds = array<i64: 2>, scalar_prefetch = 0 : i64, scratch_operands = 0 : i64, tpu.core_type = #tpu.core_type<tc>, window_params = [{transform_indices = @transform_0, window_bounds = array<i64: 1, 512>}, {pipeline_mode = #tpu.pipeline_mode<synchronous>, transform_indices = @transform_1, window_bounds = array<i64: 128, 1>}, {transform_indices = @transform_2, window_bounds = array<i64: 1, 512>}]} {
    %c0 = arith.constant 0 : index
    %c0_0 = arith.constant 0 : index
    %0 = vector.load %arg1[%c0, %c0_0] : memref<1x512xi32, #tpu.memory_space<vmem>>, vector<1x512xi32>
    %c0_1 = arith.constant 0 : index
    %c0_2 = arith.constant 0 : index
    %1 = vector.load %arg2[%c0_1, %c0_2] : memref<128x1xi32, #tpu.memory_space<vmem>>, vector<128x1xi32>
    %2 = tpu.iota {dimensions = array<i32: 0>} : vector<128x512xi32>
    %3 = vector.broadcast %0 : vector<1x512xi32> to vector<128x512xi32>
    %4 = arith.cmpi eq, %3, %2 : vector<128x512xi32>
    %5 = arith.extui %4 : vector<128x512xi1> to vector<128x512xi32>
    %6 = vector.broadcast %1 : vector<128x1xi32> to vector<128x512xi32>
    %7 = arith.muli %5, %6 : vector<128x512xi32>
    %cst = arith.constant dense<0> : vector<512xi32>
    %8 = vector.multi_reduction <add>, %7, %cst [0] : vector<128x512xi32> to vector<512xi32>
    %9 = vector.shape_cast %8 : vector<512xi32> to vector<1x512xi32>
    %c0_3 = arith.constant 0 : index
    %c0_4 = arith.constant 0 : index
    %10 = vector.load %arg3[%c0_3, %c0_4] : memref<1x512xi32, #tpu.memory_space<vmem>>, vector<1x512xi32>
    tpu.vector_store %arg3[%c0_3, %c0_4], %9 {strides = array<i32>} : memref<1x512xi32, #tpu.memory_space<vmem>>, vector<1x512xi32>,
    return
  }
  func.func @transform_0(%arg0: i32) -> (i32, i32) {
    %c0_i32 = arith.constant 0 : i32
    %c0_i32_0 = arith.constant 0 : i32
    return %c0_i32, %arg0 : i32, i32
  }
  func.func @transform_1(%arg0: i32) -> (i32, i32) {
    %c0_i32 = arith.constant 0 : i32
    %c0_i32_0 = arith.constant 0 : i32
    %c0_i32_1 = arith.constant 0 : i32
    return %c0_i32, %c0_i32_0 : i32, i32
  }
  func.func @transform_2(%arg0: i32) -> (i32, i32) {
    %c0_i32 = arith.constant 0 : i32
    %c0_i32_0 = arith.constant 0 : i32
    return %c0_i32, %arg0 : i32, i32
  }
}

</mosaic_0001>

<llo_original>
// kernel: tpu_custom_call.1
$region0: #{tpu_custom_call.1}
  #allocation0 [shape = 'u32[]', space=smem, size = 0x4, offset = 0x4, fixed_abs, tag = 'smem constant byte address 0x4 - core index']
  #allocation1 [shape = 'u32[144,128]{1,0:T(1,128)}', space=vmem, size = 0x12000, scoped, tag = 'internal scratch']
  %s0 = inlined_call_operand.vmem [shape: s32[1,1024], index: 0, kind: input, shape index: {}]
  %s1 = inlined_call_operand.vmem [shape: s32[128,1], index: 1, kind: input, shape index: {}]
  %s2 = inlined_call_operand.hbm [shape: s32[1,1024], index: 2, kind: output, shape index: {}]
  %s3 = sld [smem:[#allocation0]]
  $region41: #{tpu_custom_call.1} parent=0
    _
  %s5 = ssub.s32 1, %s3
  %s6 = scalar_select 0, %s5, %s3
  $region1: #{tpu_custom_call.1} parent=0
    #allocation2 [shape = 'u8[4096]{0}', space=vmem, size = 0x1000, scoped, tag = 'output window, operand 0']
    #allocation3 [shape = 's32[2]{0}', space=sflag, size = 0x8, scoped, tag = 'scoped memory for tpu_custom_call.1']
    %7 = vsyncpa [#allocation3], 0
    %s8 = scalar_lea.sflag [#allocation3], 1
    %9 = vsyncpa %s8, 0
    loop: start=0, step=1, limit=4
    $region2: #{tpu_custom_call.1} parent=1 // loop_pre_header
      _
    $region3: #{tpu_custom_call.1} parent=1 // loop_header
      %s11 = sphi 0, %s15
      %p12 = scmp.ge.s32.totalorder %s11, 4
      %s21 = sphi 0, %s23
      %s24 = sphi 0, %s21
      %s25 = sphi 0, %s24
      %s41 = sphi 0, %s25
      %s45 = sphi 0, %s45
      %s47 = sphi 0, %s45
      %s48 = sphi 0, %s47
      %s62 = sphi 0, %s48
      %s68 = sphi 0, %s70
      %s71 = sphi 0, %s68
      %s72 = sphi 0, %s71
      %s88 = sphi 0, %s72
    $region4: #{tpu_custom_call.1} parent=1 // loop_header_branch
      %14 = sbr.rel (%p12) target = $region8
    $region5: #{tpu_custom_call.1} parent=1 // loop_body
      %s16 = ssub.s32 %s11, 1
      %s17 = ssub.s32 %s11, 2
      %s18 = sadd.s32 %s11, 1
      %s19 = ssub.s32 %s11, %s18
      %p20 = scmp.eq.s32.totalorder %s19, 0
      %s22 = sadd.s32 %s21, 1
      %s23 = scalar_select %p20, %s21, %s22
      %p26 = pneg %p20
      %p27 = scmp.eq.s32.totalorder %s11, 1
      %p28 = por %p26, %p27
      %p29 = scmp.ne.s32.totalorder %s21, %s24
      %p30 = scmp.eq.s32.totalorder %s11, 0
      %p31 = por %p29, %p30
      %p32 = scmp.ne.s32.totalorder %s21, %s24
      %p33 = scmp.eq.s32.totalorder %s16, 1
      %p34 = por %p32, %p33
      %p35 = scmp.ne.s32.totalorder %s24, %s25
      %p36 = scmp.eq.s32.totalorder %s16, 0
      %p37 = por %p35, %p36
      %p38 = scmp.ne.s32.totalorder %s24, %s25
      %p39 = scmp.eq.s32.totalorder %s17, 1
      %p40 = por %p38, %p39
      %p42 = scmp.ne.s32.totalorder %s25, %s41
      %p43 = scmp.eq.s32.totalorder %s17, 0
      %p44 = por %p42, %p43
      %s46 = sadd.s32 %s45, 1
      %p49 = scmp.eq.s32.totalorder %s11, 1
      %p50 = scmp.ne.s32.totalorder %s45, %s47
      %p51 = scmp.eq.s32.totalorder %s11, 0
      %p52 = por %p50, %p51
      %p53 = scmp.ne.s32.totalorder %s45, %s47
      %p54 = scmp.eq.s32.totalorder %s16, 1
      %p55 = por %p53, %p54
      %p56 = scmp.ne.s32.totalorder %s47, %s48
      %p57 = scmp.eq.s32.totalorder %s16, 0
      %p58 = por %p56, %p57
      %p59 = scmp.ne.s32.totalorder %s47, %s48
      %p60 = scmp.eq.s32.totalorder %s17, 1
      %p61 = por %p59, %p60
      %p63 = scmp.ne.s32.totalorder %s48, %s62
      %p64 = scmp.eq.s32.totalorder %s17, 0
      %p65 = por %p63, %p64
      %s66 = ssub.s32 %s11, %s18
      %p67 = scmp.eq.s32.totalorder %s66, 0
      %s69 = sadd.s32 %s68, 1
      %s70 = scalar_select %p67, %s68, %s69
      %p73 = pneg %p67
      %p74 = scmp.eq.s32.totalorder %s11, 1
      %p75 = por %p73, %p74
      %p76 = scmp.ne.s32.totalorder %s68, %s71
      %p77 = scmp.eq.s32.totalorder %s11, 0
      %p78 = por %p76, %p77
      %p79 = scmp.ne.s32.totalorder %s68, %s71
      %p80 = scmp.eq.s32.totalorder %s16, 1
      %p81 = por %p79, %p80
      %p82 = scmp.ne.s32.totalorder %s71, %s72
      %p83 = scmp.eq.s32.totalorder %s16, 0
      %p84 = por %p82, %p83
      %p85 = scmp.ne.s32.totalorder %s71, %s72
      %p86 = scmp.eq.s32.totalorder %s17, 1
      %p87 = por %p85, %p86
      %p89 = scmp.ne.s32.totalorder %s72, %s88
      %p90 = scmp.eq.s32.totalorder %s17, 0
      %p91 = por %p89, %p90
      %p92 = scmp.le.s32.totalorder 1, %s11
      %p93 = scmp.lt.s32.totalorder %s11, 3
      %p94 = pnand %p92, %p93
      %p95 = pneg %p94
      // Predicated region
      $region9: #{tpu_custom_call.1} parent=5 // pred_check
        _
      $region10: #{tpu_custom_call.1} parent=5 // pred_check_branch
        %97 = sbr.rel (%p94) target = $region12
      $region11: #{tpu_custom_call.1} parent=5 // pred_region
        %s98 = ssub.s32 %s11, 1
        // Predicated region
        $region13: #{tpu_custom_call.1} parent=11 // pred_check
          %p99 = pneg %p58
        $region14: #{tpu_custom_call.1} parent=11 // pred_check_branch
          %101 = sbr.rel (%p99) target = $region16
        $region15: #{tpu_custom_call.1} parent=11 // pred_region
          _
        $region16: #{tpu_custom_call.1} parent=11 // pred_fallthru
          _
      $region12: #{tpu_custom_call.1} parent=5 // pred_fallthru
        _
      %p102 = scmp.lt.s32.totalorder %s11, 2
      // Predicated region
      $region17: #{tpu_custom_call.1} parent=5 // pred_check
        %p103 = pneg %p102
      $region18: #{tpu_custom_call.1} parent=5 // pred_check_branch
        %105 = sbr.rel (%p103) target = $region20
      $region19: #{tpu_custom_call.1} parent=5 // pred_region
        // Predicated region
        $region21: #{tpu_custom_call.1} parent=19 // pred_check
          %p106 = pneg %p31
        $region22: #{tpu_custom_call.1} parent=19 // pred_check_branch
          %108 = sbr.rel (%p106) target = $region24
        $region23: #{tpu_custom_call.1} parent=19 // pred_region
          %s109 = smul.u32 4, %s11
          %p110 = scmp.lt.s32.totalorder %s109, 7
          %s111 = scalar_select %p110, %s109, 7
          %s112 = scalar_lea.vmem %s0, %s111
          %s113 = smul.u32 4, %s11
        $region24: #{tpu_custom_call.1} parent=19 // pred_fallthru
          _
      $region20: #{tpu_custom_call.1} parent=5 // pred_fallthru
        _
      %p114 = scmp.le.s32.totalorder 1, %s11
      %p115 = scmp.lt.s32.totalorder %s11, 3
      %p116 = pnand %p114, %p115
      %p117 = pneg %p116
      // Predicated region
      $region25: #{tpu_custom_call.1} parent=5 // pred_check
        _
      $region26: #{tpu_custom_call.1} parent=5 // pred_check_branch
        %119 = sbr.rel (%p116) target = $region28
      $region27: #{tpu_custom_call.1} parent=5 // pred_region
        %s120 = ssub.s32 %s11, 1
        %s121 = smul.u32 4, %s16
        %p122 = scmp.lt.s32.totalorder %s121, 7
        %s123 = scalar_select %p122, %s121, 7
        %s124 = scalar_lea.vmem %s0, %s123
        %p125 = pneg %p37
        %p126 = pneg %p34
        %p127 = pneg %p58
        %p128 = pneg %p55
        %p129 = pneg %p84
        %p130 = pneg %p81
        %s131 = sand.u32 %s71, 1
        %s132 = scalar_lea.sflag [#allocation3], %s131
        %s133 = sand.u32 %s71, 1
        %s134 = smul.addr %s133, 4
        %s135 = scalar_lea.vmem [#allocation2], %s134
        %s136 = smul.u32 4, %s16
        %p137 = scmp.lt.s32.totalorder %s136, 7
        %s138 = scalar_select %p137, %s136, 7
        %s139 = scalar_lea.vmem %s0, %s138
        %s140 = smul.u32 4, %s16
        %s141 = smul.u32 4, %s16
        %v142 = vld [vmem:[%s139] sm:$0xf]
        %v143 = vld [vmem:[%s1] sm:$0xff]
        %v144 = vld [vmem:[%s1 + $0x8] sm:$0xff]
        %v145 = vld [vmem:[%s1 + $0x10] sm:$0xff]
        %v146 = vld [vmem:[%s1 + $0x18] sm:$0xff]
        %v147 = vld [vmem:[%s1 + $0x20] sm:$0xff]
        %v148 = vld [vmem:[%s1 + $0x28] sm:$0xff]
        %v149 = vld [vmem:[%s1 + $0x30] sm:$0xff]
        %v150 = vld [vmem:[%s1 + $0x38] sm:$0xff]
        %v151 = vld [vmem:[%s1 + $0x40] sm:$0xff]
        %v152 = vld [vmem:[%s1 + $0x48] sm:$0xff]
        %v153 = vld [vmem:[%s1 + $0x50] sm:$0xff]
        %v154 = vld [vmem:[%s1 + $0x58] sm:$0xff]
        %v155 = vld [vmem:[%s1 + $0x60] sm:$0xff]
        %v156 = vld [vmem:[%s1 + $0x68] sm:$0xff]
        %v157 = vld [vmem:[%s1 + $0x70] sm:$0xff]
        %v158 = vld [vmem:[%s1 + $0x78] sm:$0xff]
        %v159 = vlaneseq
        %v160 = vshrl.u32 %v159, 7
        %v161 = vadd.s32 %v160, 8
        %v162 = vadd.s32 %v160, 16
        %v163 = vadd.s32 %v160, 24
        %v164 = vadd.s32 %v160, 32
        %v165 = vadd.s32 %v160, 40
        %v166 = vadd.s32 %v160, 48
        %v167 = vadd.s32 %v160, 56
        %v168 = vadd.s32 %v160, 64
        %v169 = vadd.s32 %v160, 72
        %v170 = vadd.s32 %v160, 80
        %v171 = vadd.s32 %v160, 88
        %v172 = vadd.s32 %v160, 96
        %v173 = vadd.s32 %v160, 104
        %v174 = vadd.s32 %v160, 112
        %v175 = vadd.s32 %v160, 120
        %v176 = vlaneseq
        %v177 = vshrl.u32 %v176, 7
        %v178 = vsub.s32 0, %v177
        %v179 = vrot.slane %v142, %v178
        %v180 = vlaneseq
        %v181 = vshrl.u32 %v180, 7
        %v182 = vsub.s32 1, %v181
        %v183 = vrot.slane %v142, %v182
        %v184 = vlaneseq
        %v185 = vshrl.u32 %v184, 7
        %v186 = vsub.s32 2, %v185
        %v187 = vrot.slane %v142, %v186
        %v188 = vlaneseq
        %v189 = vshrl.u32 %v188, 7
        %v190 = vsub.s32 3, %v189
        %v191 = vrot.slane %v142, %v190
        %vm192 = vcmp.eq.s32.totalorder %v179, %v160
        %vm193 = vcmp.eq.s32.totalorder %v183, %v160
        %vm194 = vcmp.eq.s32.totalorder %v187, %v160
        %vm195 = vcmp.eq.s32.totalorder %v191, %v160
        %vm196 = vcmp.eq.s32.totalorder %v179, %v161
        %vm197 = vcmp.eq.s32.totalorder %v183, %v161
        %vm198 = vcmp.eq.s32.totalorder %v187, %v161
        %vm199 = vcmp.eq.s32.totalorder %v191, %v161
        %vm200 = vcmp.eq.s32.totalorder %v179, %v162
        %vm201 = vcmp.eq.s32.totalorder %v183, %v162
        %vm202 = vcmp.eq.s32.totalorder %v187, %v162
        %vm203 = vcmp.eq.s32.totalorder %v191, %v162
        %vm204 = vcmp.eq.s32.totalorder %v179, %v163
        %vm205 = vcmp.eq.s32.totalorder %v183, %v163
        %vm206 = vcmp.eq.s32.totalorder %v187, %v163
        %vm207 = vcmp.eq.s32.totalorder %v191, %v163
        %vm208 = vcmp.eq.s32.totalorder %v179, %v164
        %vm209 = vcmp.eq.s32.totalorder %v183, %v164
        %vm210 = vcmp.eq.s32.totalorder %v187, %v164
        %vm211 = vcmp.eq.s32.totalorder %v191, %v164
        %vm212 = vcmp.eq.s32.totalorder %v179, %v165
        %vm213 = vcmp.eq.s32.totalorder %v183, %v165
        %vm214 = vcmp.eq.s32.totalorder %v187, %v165
        %vm215 = vcmp.eq.s32.totalorder %v191, %v165
        %vm216 = vcmp.eq.s32.totalorder %v179, %v166
        %vm217 = vcmp.eq.s32.totalorder %v183, %v166
        %vm218 = vcmp.eq.s32.totalorder %v187, %v166
        %vm219 = vcmp.eq.s32.totalorder %v191, %v166
        %vm220 = vcmp.eq.s32.totalorder %v179, %v167
        %vm221 = vcmp.eq.s32.totalorder %v183, %v167
        %vm222 = vcmp.eq.s32.totalorder %v187, %v167
        %vm223 = vcmp.eq.s32.totalorder %v191, %v167
        %vm224 = vcmp.eq.s32.totalorder %v179, %v168
        %vm225 = vcmp.eq.s32.totalorder %v183, %v168
        %vm226 = vcmp.eq.s32.totalorder %v187, %v168
        %vm227 = vcmp.eq.s32.totalorder %v191, %v168
        %vm228 = vcmp.eq.s32.totalorder %v179, %v169
        %vm229 = vcmp.eq.s32.totalorder %v183, %v169
        %vm230 = vcmp.eq.s32.totalorder %v187, %v169
        %vm231 = vcmp.eq.s32.totalorder %v191, %v169
        %vm232 = vcmp.eq.s32.totalorder %v179, %v170
        %vm233 = vcmp.eq.s32.totalorder %v183, %v170
        %vm234 = vcmp.eq.s32.totalorder %v187, %v170
        %vm235 = vcmp.eq.s32.totalorder %v191, %v170
        %vm236 = vcmp.eq.s32.totalorder %v179, %v171
        %vm237 = vcmp.eq.s32.totalorder %v183, %v171
        %vm238 = vcmp.eq.s32.totalorder %v187, %v171
        %vm239 = vcmp.eq.s32.totalorder %v191, %v171
        %vm240 = vcmp.eq.s32.totalorder %v179, %v172
        %vm241 = vcmp.eq.s32.totalorder %v183, %v172
        %vm242 = vcmp.eq.s32.totalorder %v187, %v172
        %vm243 = vcmp.eq.s32.totalorder %v191, %v172
        %vm244 = vcmp.eq.s32.totalorder %v179, %v173
        %vm245 = vcmp.eq.s32.totalorder %v183, %v173
        %vm246 = vcmp.eq.s32.totalorder %v187, %v173
        %vm247 = vcmp.eq.s32.totalorder %v191, %v173
        %vm248 = vcmp.eq.s32.totalorder %v179, %v174
        %vm249 = vcmp.eq.s32.totalorder %v183, %v174
        %vm250 = vcmp.eq.s32.totalorder %v187, %v174
        %vm251 = vcmp.eq.s32.totalorder %v191, %v174
        %vm252 = vcmp.eq.s32.totalorder %v179, %v175
        %vm253 = vcmp.eq.s32.totalorder %v183, %v175
        %vm254 = vcmp.eq.s32.totalorder %v187, %v175
        %vm255 = vcmp.eq.s32.totalorder %v191, %v175
        %v256 = vsel %vm192, 1, 0
        %v257 = vsel %vm193, 1, 0
        %v258 = vsel %vm194, 1, 0
        %v259 = vsel %vm195, 1, 0
        %v260 = vsel %vm196, 1, 0
        %v261 = vsel %vm197, 1, 0
        %v262 = vsel %vm198, 1, 0
        %v263 = vsel %vm199, 1, 0
        %v264 = vsel %vm200, 1, 0
        %v265 = vsel %vm201, 1, 0
        %v266 = vsel %vm202, 1, 0
        %v267 = vsel %vm203, 1, 0
        %v268 = vsel %vm204, 1, 0
        %v269 = vsel %vm205, 1, 0
        %v270 = vsel %vm206, 1, 0
        %v271 = vsel %vm207, 1, 0
        %v272 = vsel %vm208, 1, 0
        %v273 = vsel %vm209, 1, 0
        %v274 = vsel %vm210, 1, 0
        %v275 = vsel %vm211, 1, 0
        %v276 = vsel %vm212, 1, 0
        %v277 = vsel %vm213, 1, 0
        %v278 = vsel %vm214, 1, 0
        %v279 = vsel %vm215, 1, 0
        %v280 = vsel %vm216, 1, 0
        %v281 = vsel %vm217, 1, 0
        %v282 = vsel %vm218, 1, 0
        %v283 = vsel %vm219, 1, 0
        %v284 = vsel %vm220, 1, 0
        %v285 = vsel %vm221, 1, 0
        %v286 = vsel %vm222, 1, 0
        %v287 = vsel %vm223, 1, 0
        %v288 = vsel %vm224, 1, 0
        %v289 = vsel %vm225, 1, 0
        %v290 = vsel %vm226, 1, 0
        %v291 = vsel %vm227, 1, 0
        %v292 = vsel %vm228, 1, 0
        %v293 = vsel %vm229, 1, 0
        %v294 = vsel %vm230, 1, 0
        %v295 = vsel %vm231, 1, 0
        %v296 = vsel %vm232, 1, 0
        %v297 = vsel %vm233, 1, 0
        %v298 = vsel %vm234, 1, 0
        %v299 = vsel %vm235, 1, 0
        %v300 = vsel %vm236, 1, 0
        %v301 = vsel %vm237, 1, 0
        %v302 = vsel %vm238, 1, 0
        %v303 = vsel %vm239, 1, 0
        %v304 = vsel %vm240, 1, 0
        %v305 = vsel %vm241, 1, 0
        %v306 = vsel %vm242, 1, 0
        %v307 = vsel %vm243, 1, 0
        %v308 = vsel %vm244, 1, 0
        %v309 = vsel %vm245, 1, 0
        %v310 = vsel %vm246, 1, 0
        %v311 = vsel %vm247, 1, 0
        %v312 = vsel %vm248, 1, 0
        %v313 = vsel %vm249, 1, 0
        %v314 = vsel %vm250, 1, 0
        %v315 = vsel %vm251, 1, 0
        %v316 = vsel %vm252, 1, 0
        %v317 = vsel %vm253, 1, 0
        %v318 = vsel %vm254, 1, 0
        %v319 = vsel %vm255, 1, 0
        %320 = vset.pattern.permute.xlu0 0
        %321 = vperm.xlu0 %320, %v143
        %v322 = vpop.permute.xlu0 %321
        %323 = vset.pattern.permute.xlu0 0
        %324 = vperm.xlu0 %323, %v144
        %v325 = vpop.permute.xlu0 %324
        %326 = vset.pattern.permute.xlu0 0
        %327 = vperm.xlu0 %326, %v145
        %v328 = vpop.permute.xlu0 %327
        %329 = vset.pattern.permute.xlu0 0
        %330 = vperm.xlu0 %329, %v146
        %v331 = vpop.permute.xlu0 %330
        %332 = vset.pattern.permute.xlu0 0
        %333 = vperm.xlu0 %332, %v147
        %v334 = vpop.permute.xlu0 %333
        %335 = vset.pattern.permute.xlu0 0
        %336 = vperm.xlu0 %335, %v148
        %v337 = vpop.permute.xlu0 %336
        %338 = vset.pattern.permute.xlu0 0
        %339 = vperm.xlu0 %338, %v149
        %v340 = vpop.permute.xlu0 %339
        %341 = vset.pattern.permute.xlu0 0
        %342 = vperm.xlu0 %341, %v150
        %v343 = vpop.permute.xlu0 %342
        %344 = vset.pattern.permute.xlu0 0
        %345 = vperm.xlu0 %344, %v151
        %v346 = vpop.permute.xlu0 %345
        %347 = vset.pattern.permute.xlu0 0
        %348 = vperm.xlu0 %347, %v152
        %v349 = vpop.permute.xlu0 %348
        %350 = vset.pattern.permute.xlu0 0
        %351 = vperm.xlu0 %350, %v153
        %v352 = vpop.permute.xlu0 %351
        %353 = vset.pattern.permute.xlu0 0
        %354 = vperm.xlu0 %353, %v154
        %v355 = vpop.permute.xlu0 %354
        %356 = vset.pattern.permute.xlu0 0
        %357 = vperm.xlu0 %356, %v155
        %v358 = vpop.permute.xlu0 %357
        %359 = vset.pattern.permute.xlu0 0
        %360 = vperm.xlu0 %359, %v156
        %v361 = vpop.permute.xlu0 %360
        %362 = vset.pattern.permute.xlu0 0
        %363 = vperm.xlu0 %362, %v157
        %v364 = vpop.permute.xlu0 %363
        %365 = vset.pattern.permute.xlu0 0
        %366 = vperm.xlu0 %365, %v158
        %v367 = vpop.permute.xlu0 %366
        %v368 = vmul.u32 %v256, %v322
        %v369 = vmul.u32 %v257, %v322
        %v370 = vmul.u32 %v258, %v322
        %v371 = vmul.u32 %v259, %v322
        %v372 = vmul.u32 %v260, %v325
        %v373 = vmul.u32 %v261, %v325
        %v374 = vmul.u32 %v262, %v325
        %v375 = vmul.u32 %v263, %v325
        %v376 = vmul.u32 %v264, %v328
        %v377 = vmul.u32 %v265, %v328
        %v378 = vmul.u32 %v266, %v328
        %v379 = vmul.u32 %v267, %v328
        %v380 = vmul.u32 %v268, %v331
        %v381 = vmul.u32 %v269, %v331
        %v382 = vmul.u32 %v270, %v331
        %v383 = vmul.u32 %v271, %v331
        %v384 = vmul.u32 %v272, %v334
        %v385 = vmul.u32 %v273, %v334
        %v386 = vmul.u32 %v274, %v334
        %v387 = vmul.u32 %v275, %v334
        %v388 = vmul.u32 %v276, %v337
        %v389 = vmul.u32 %v277, %v337
        %v390 = vmul.u32 %v278, %v337
        %v391 = vmul.u32 %v279, %v337
        %v392 = vmul.u32 %v280, %v340
        %v393 = vmul.u32 %v281, %v340
        %v394 = vmul.u32 %v282, %v340
        %v395 = vmul.u32 %v283, %v340
        %v396 = vmul.u32 %v284, %v343
        %v397 = vmul.u32 %v285, %v343
        %v398 = vmul.u32 %v286, %v343
        %v399 = vmul.u32 %v287, %v343
        %v400 = vmul.u32 %v288, %v346
        %v401 = vmul.u32 %v289, %v346
        %v402 = vmul.u32 %v290, %v346
        %v403 = vmul.u32 %v291, %v346
        %v404 = vmul.u32 %v292, %v349
        %v405 = vmul.u32 %v293, %v349
        %v406 = vmul.u32 %v294, %v349
        %v407 = vmul.u32 %v295, %v349
        %v408 = vmul.u32 %v296, %v352
        %v409 = vmul.u32 %v297, %v352
        %v410 = vmul.u32 %v298, %v352
        %v411 = vmul.u32 %v299, %v352
        %v412 = vmul.u32 %v300, %v355
        %v413 = vmul.u32 %v301, %v355
        %v414 = vmul.u32 %v302, %v355
        %v415 = vmul.u32 %v303, %v355
        %v416 = vmul.u32 %v304, %v358
        %v417 = vmul.u32 %v305, %v358
        %v418 = vmul.u32 %v306, %v358
        %v419 = vmul.u32 %v307, %v358
        %v420 = vmul.u32 %v308, %v361
        %v421 = vmul.u32 %v309, %v361
        %v422 = vmul.u32 %v310, %v361
        %v423 = vmul.u32 %v311, %v361
        %v424 = vmul.u32 %v312, %v364
        %v425 = vmul.u32 %v313, %v364
        %v426 = vmul.u32 %v314, %v364
        %v427 = vmul.u32 %v315, %v364
        %v428 = vmul.u32 %v316, %v367
        %v429 = vmul.u32 %v317, %v367
        %v430 = vmul.u32 %v318, %v367
        %v431 = vmul.u32 %v319, %v367
        %v432 = vadd.s32 %v368, %v372
        %v433 = vadd.s32 %v432, %v376
        %v434 = vadd.s32 %v433, %v380
        %v435 = vadd.s32 %v434, %v384
        %v436 = vadd.s32 %v435, %v388
        %v437 = vadd.s32 %v436, %v392
        %v438 = vadd.s32 %v437, %v396
        %v439 = vadd.s32 %v438, %v400
        %v440 = vadd.s32 %v439, %v404
        %v441 = vadd.s32 %v440, %v408
        %v442 = vadd.s32 %v441, %v412
        %v443 = vadd.s32 %v442, %v416
        %v444 = vadd.s32 %v443, %v420
        %v445 = vadd.s32 %v444, %v424
        %v446 = vadd.s32 %v445, %v428
        %v447 = vrot.slane %v446, 4
        %v448 = vadd.s32 %v446, %v447
        %v449 = vrot.slane %v448, 2
        %v450 = vadd.s32 %v448, %v449
        %v451 = vrot.slane %v450, 1
        %v452 = vadd.s32 %v450, %v451
        %v453 = vadd.s32 %v369, %v373
        %v454 = vadd.s32 %v453, %v377
        %v455 = vadd.s32 %v454, %v381
        %v456 = vadd.s32 %v455, %v385
        %v457 = vadd.s32 %v456, %v389
        %v458 = vadd.s32 %v457, %v393
        %v459 = vadd.s32 %v458, %v397
        %v460 = vadd.s32 %v459, %v401
        %v461 = vadd.s32 %v460, %v405
        %v462 = vadd.s32 %v461, %v409
        %v463 = vadd.s32 %v462, %v413
        %v464 = vadd.s32 %v463, %v417
        %v465 = vadd.s32 %v464, %v421
        %v466 = vadd.s32 %v465, %v425
        %v467 = vadd.s32 %v466, %v429
        %v468 = vrot.slane %v467, 4
        %v469 = vadd.s32 %v467, %v468
        %v470 = vrot.slane %v469, 2
        %v471 = vadd.s32 %v469, %v470
        %v472 = vrot.slane %v471, 1
        %v473 = vadd.s32 %v471, %v472
        %v474 = vadd.s32 %v370, %v374
        %v475 = vadd.s32 %v474, %v378
        %v476 = vadd.s32 %v475, %v382
        %v477 = vadd.s32 %v476, %v386
        %v478 = vadd.s32 %v477, %v390
        %v479 = vadd.s32 %v478, %v394
        %v480 = vadd.s32 %v479, %v398
        %v481 = vadd.s32 %v480, %v402
        %v482 = vadd.s32 %v481, %v406
        %v483 = vadd.s32 %v482, %v410
        %v484 = vadd.s32 %v483, %v414
        %v485 = vadd.s32 %v484, %v418
        %v486 = vadd.s32 %v485, %v422
        %v487 = vadd.s32 %v486, %v426
        %v488 = vadd.s32 %v487, %v430
        %v489 = vrot.slane %v488, 4
        %v490 = vadd.s32 %v488, %v489
        %v491 = vrot.slane %v490, 2
        %v492 = vadd.s32 %v490, %v491
        %v493 = vrot.slane %v492, 1
        %v494 = vadd.s32 %v492, %v493
        %v495 = vadd.s32 %v371, %v375
        %v496 = vadd.s32 %v495, %v379
        %v497 = vadd.s32 %v496, %v383
        %v498 = vadd.s32 %v497, %v387
        %v499 = vadd.s32 %v498, %v391
        %v500 = vadd.s32 %v499, %v395
        %v501 = vadd.s32 %v500, %v399
        %v502 = vadd.s32 %v501, %v403
        %v503 = vadd.s32 %v502, %v407
        %v504 = vadd.s32 %v503, %v411
        %v505 = vadd.s32 %v504, %v415
        %v506 = vadd.s32 %v505, %v419
        %v507 = vadd.s32 %v506, %v423
        %v508 = vadd.s32 %v507, %v427
        %v509 = vadd.s32 %v508, %v431
        %v510 = vrot.slane %v509, 4
        %v511 = vadd.s32 %v509, %v510
        %v512 = vrot.slane %v511, 2
        %v513 = vadd.s32 %v511, %v512
        %v514 = vrot.slane %v513, 1
        %v515 = vadd.s32 %v513, %v514
        %v516 = vcombine.low %v452, %v473
        %v517 = vcombine.low %v494, %v515
        %v519 = vunpack.c.l.s4 1966171168
        %v520 = vunpack.c.0.s8 %v519
        %v521 = vlaneseq
        %v522 = vshrl.u32 %v521, 7
        %v523 = vsub.s32 %v520, %v522
        %v524 = vrot.slane %v516, %v523
        %v526 = vunpack.c.l.s4 1966171168
        %v527 = vunpack.c.0.s8 %v526
        %v528 = vlaneseq
        %v529 = vshrl.u32 %v528, 7
        %v530 = vsub.s32 %v527, %v529
        %v531 = vrot.slane %v517, %v530
        %v532 = vcombine.low %v524, %v531
        %v534 = vunpack.c.l.s4 1966171168
        %v535 = vunpack.c.0.s8 %v534
        %v536 = vlaneseq
        %v537 = vshrl.u32 %v536, 7
        %v538 = vsub.s32 %v535, %v537
        %v539 = vrot.slane %v532, %v538
        %v540 = vlaneseq
        %vm541 = vcmp.ge.s32.totalorder %v540, 0
        %vm542 = vcmp.lt.s32.totalorder %v540, 512
        %vm543 = vmand %vm541, %vm542
        %544 = vst.msk [vmem:[%s135] sm:$0xf] %vm543, %v539
        %s545 = sand.u32 %s71, 1
        %s546 = scalar_lea.sflag [#allocation3], %s545
        %s547 = sand.u32 %s71, 1
        %s548 = smul.addr %s547, 4
        %s549 = scalar_lea.vmem [#allocation2], %s548
        // Predicated region
        $region29: #{tpu_custom_call.1} parent=27 // pred_check
          %p550 = pneg %p81
        $region30: #{tpu_custom_call.1} parent=27 // pred_check_branch
          %552 = sbr.rel (%p550) target = $region32
        $region31: #{tpu_custom_call.1} parent=27 // pred_region
          %s553 = smul.u32 4, %s16
          %s555 = ssub.s32 64, 64
          %556 = vsyncadd %s546, %s555
          %s557 = smul.addr %s553, 16
          %s558 = scalar_lea.hbm %s2, %s557
          %s560 = sshll.u32 %s549, 4
          %s561 = int_to_ptr.vmem [resolvable:$true] %s560
          %563 = dma.vmem_to_hbm [thread:$0]  %s561, 64, %s558, %s546
        $region32: #{tpu_custom_call.1} parent=27 // pred_fallthru
          _
      $region28: #{tpu_custom_call.1} parent=5 // pred_fallthru
        _
      %p564 = scmp.le.s32.totalorder 2, %s11
      // Predicated region
      $region33: #{tpu_custom_call.1} parent=5 // pred_check
        %p565 = pneg %p564
      $region34: #{tpu_custom_call.1} parent=5 // pred_check_branch
        %567 = sbr.rel (%p565) target = $region36
      $region35: #{tpu_custom_call.1} parent=5 // pred_region
        %s568 = ssub.s32 %s11, 2
        // Predicated region
        $region37: #{tpu_custom_call.1} parent=35 // pred_check
          %p569 = pneg %p87
        $region38: #{tpu_custom_call.1} parent=35 // pred_check_branch
          %571 = sbr.rel (%p569) target = $region40
        $region39: #{tpu_custom_call.1} parent=35 // pred_region
          %s572 = sand.u32 %s72, 1
          %s573 = scalar_lea.sflag [#allocation3], %s572
          %s574 = sand.u32 %s72, 1
          %s575 = smul.addr %s574, 4
          %s576 = scalar_lea.vmem [#allocation2], %s575
          %577 = dma.done %s573, 64
        $region40: #{tpu_custom_call.1} parent=35 // pred_fallthru
          _
      $region36: #{tpu_custom_call.1} parent=5 // pred_fallthru
        _
    $region6: #{tpu_custom_call.1} parent=1 // loop_footer
      %s15 = sadd.s32 1, %s11
    $region7: #{tpu_custom_call.1} parent=1 // loop_footer_branch
      %10 = sbr.rel target = $region3
    $region8: #{tpu_custom_call.1} parent=1 // loop_exit
      _
    %578 = vsyncpa [#allocation3], 1
    %s579 = scalar_lea.sflag [#allocation3], 1
    %580 = vsyncpa %s579, 1

</llo_original>
